<compile_context>
chip_gen: v7x
topology: tpu7x:2x2x1
jax: 0.10.0
libtpu: 0.0.40
codegen_flags: <defaults>
</compile_context>

<pallas_src>
import functools
import math

import jax
import jax.numpy as jnp
from jax.experimental import pallas as pl
from jax.experimental.pallas import tpu as pltpu

_LANE = 128
_SUBLANE = 8
_MAX_TN = 4096                      # lane-dim tile cap (multiple of 128)
_X_BUDGET = 16 * 1024 * 1024        # double-buffered x footprint budget (bytes)
_MAX_TB = 512                       # sublane-dim tile cap


def _newsvendor_kernel(theta_ref, x_ref, o_ref, *, k, u, n, tn, mask_tail):
    # theta_ref: (1, 1) scalar in SMEM
    # x_ref:     (tb, tn) tile in VMEM, native dtype
    # o_ref:     (tb, 1) f32 block, resident across the feature (reduction) axis
    j = pl.program_id(1)

    @pl.when(j == 0)
    def _init():
        o_ref[...] = jnp.zeros_like(o_ref)

    theta = theta_ref[0, 0]
    x = x_ref[...].astype(jnp.float32)       # upcast in-vreg (v5e has no bf16 VALU)
    m = jnp.minimum(theta, x)                # (tb, tn), VPU

    if mask_tail:                            # static: only emitted if N % tn != 0
        col = jax.lax.broadcasted_iota(jnp.int32, m.shape, 1)
        m = jnp.where(col < (n - j * tn), m, 0.0)   # select: padded NaN can't leak

    # cross-lane reduce goes to the XLU slot (free w.r.t. the VPU/mem path)
    o_ref[...] += jnp.sum(m, axis=-1, keepdims=True)   # (tb, 1)

    @pl.when(j == pl.num_programs(1) - 1)
    def _finalize():
        # apply k/u scaling once per row on the reduced result only
        o_ref[...] = k * theta - (u / n) * o_ref[...]


def _choose_tiles(B, N, itemsize):
    """Pick (tb, tn) so the double-buffered x footprint stays small on every gen."""
    # Lane (feature) tile: multiple of 128 when possible, else the full dim
    # (block == full array dim is always layout-legal). Huge unaligned dims are
    # capped to a 128-multiple and the padded tail is masked in-kernel.
    if N % _LANE == 0:
        tn = min(N, _MAX_TN)
    elif N <= _MAX_TN:
        tn = N
    else:
        tn = _MAX_TN
    # Batch (sublane) tile: as many rows as the double-buffered-x budget allows
    # (fits comfortably inside v7x's 64 MiB VMEM / 32 MiB scoped limit).
    rows = _X_BUDGET // (2 * tn * itemsize)
    rows = max(_SUBLANE, (rows // _SUBLANE) * _SUBLANE)
    rows = min(rows, _MAX_TB)
    # Keep >= 2 batch grid steps when B is large enough so the "parallel" batch
    # axis can shard across the two TensorCores on v7x (no-op on v5e/v6e).
    if B > _SUBLANE:
        half = -(-B // 2)                          # ceil(B / 2)
        half = -(-half // _SUBLANE) * _SUBLANE     # round up to sublane multiple
        rows = min(rows, half)
    tb = B if B <= rows else rows
    return tb, tn


def newsvendor_loss(x, theta, k, u, *, tb=None, tn=None):
    """x: (..., N) float array (f32 or bf16), theta: shape-(1,) f32 parameter."""
    *lead, N = x.shape
    B = math.prod(lead) if lead else 1
    x2 = x.reshape(B, N)                      # collapse leading dims (free, row-major)

    itemsize = jnp.dtype(x2.dtype).itemsize
    auto_tb, auto_tn = _choose_tiles(B, N, itemsize)
    tb = auto_tb if tb is None else tb
    tn = auto_tn if tn is None else tn

    grid = (pl.cdiv(B, tb), pl.cdiv(N, tn))   # batch parallel, reduction axis last
    mask_tail = (N % tn) != 0

    theta_smem = jnp.asarray(theta, jnp.float32).reshape(1, 1)

    kernel = functools.partial(
        _newsvendor_kernel, k=float(k), u=float(u), n=N, tn=tn, mask_tail=mask_tail
    )

    out = pl.pallas_call(
        kernel,
        out_shape=jax.ShapeDtypeStruct((B, 1), jnp.float32),
        grid_spec=pltpu.PrefetchScalarGridSpec(
            num_scalar_prefetch=0,
            grid=grid,
            in_specs=[
                pl.BlockSpec(memory_space=pltpu.SMEM),           # theta (1, 1)
                pl.BlockSpec((tb, tn), lambda i, j: (i, j)),     # x tile, native dtype
            ],
            out_specs=pl.BlockSpec((tb, 1), lambda i, j: (i, 0)),  # per-row accumulator
        ),
        compiler_params=pltpu.CompilerParams(
            dimension_semantics=("parallel", "arbitrary"),
            # Tiles are sized so the double-buffered footprint stays well under
            # this limit on v5e/v6e (128 MiB VMEM) and v7x (64 MiB VMEM).
            vmem_limit_bytes=32 * 1024 * 1024,
        ),
    )(theta_smem, x2)

    return out.reshape(*lead, 1) if lead else out.reshape(1)


def newsvendor_loss_ref(x, theta, k, u):
    gains = k * theta
    losses = u * jnp.minimum(theta, x.astype(jnp.float32))
    return jnp.mean(gains - losses, axis=-1, keepdims=True)


if __name__ == "__main__":
    key = jax.random.PRNGKey(0)
    kx, kt = jax.random.split(key)

    # deterministic "module init": theta_ ~ U[0,1), shape (1,)
    theta = jax.random.uniform(kt, (1,), dtype=jnp.float32)
    k_const, u_const = 5.0, 7.0

    def check(x, **kw):
        out = jax.block_until_ready(newsvendor_loss(x, theta, k_const, u_const, **kw))
        ref = newsvendor_loss_ref(x, theta, k_const, u_const)
        assert out.shape == ref.shape, (out.shape, ref.shape)
        assert jnp.allclose(out, ref, atol=1e-5, rtol=1e-5), (out, ref)

    # 1) small aligned case, single tile
    x = jax.random.normal(kx, (8, 128), dtype=jnp.float32)
    check(x)

    # 2) multi-tile grid: 2 batch tiles x 2 feature tiles (exercises the accumulator)
    x2 = jax.random.normal(kx, (16, 256), dtype=jnp.float32)
    check(x2, tb=8, tn=128)

    # 3) feature dim not a multiple of the tile -> masked last feature tile
    x3 = jax.random.normal(kx, (8, 192), dtype=jnp.float32)
    check(x3, tn=128)

    # 4) auto-tiling with unaligned feature dim and >1 batch tile
    x4 = jax.random.normal(kx, (16, 200), dtype=jnp.float32)
    check(x4)

    # 5) ragged batch dim -> padded last batch tile (discarded on output)
    x5 = jax.random.normal(kx, (12, 128), dtype=jnp.float32)
    check(x5, tb=8)

    # 6) native bf16 input streamed with no wrapper-side f32 copy
    x6 = jax.random.normal(kx, (8, 128), dtype=jnp.float32).astype(jnp.bfloat16)
    check(x6)

    print("KERNEL_OK")
</pallas_src>

<mosaic_0001>
module attributes {stable_mosaic.version = 11 : i64} {
  func.func @_newsvendor_kernel(%arg0: i32, %arg1: i32, %arg2: memref<1x1xf32, #tpu.memory_space<smem>>, %arg3: memref<8x128xf32, #tpu.memory_space<vmem>>, %arg4: memref<8x1xf32, #tpu.memory_space<vmem>>) attributes {dimension_semantics = [#tpu.dimension_semantics<parallel>, #tpu.dimension_semantics<arbitrary>], iteration_bounds = array<i64: 1, 1>, scalar_prefetch = 0 : i64, scratch_operands = 0 : i64, tpu.core_type = #tpu.core_type<tc>, window_params = [{transform_indices = @transform_0, window_bounds = array<i64: 1, 1>}, {transform_indices = @transform_1, window_bounds = array<i64: 8, 128>}, {transform_indices = @transform_2, window_bounds = array<i64: 8, 1>}]} {
    %c0_i32 = arith.constant 0 : i32
    %0 = arith.cmpi eq, %arg1, %c0_i32 : i32
    %1 = arith.extui %0 : i1 to i32
    %c0_i32_0 = arith.constant 0 : i32
    %2 = arith.cmpi ne, %1, %c0_i32_0 : i32
    scf.if %2 {
      %cst_10 = arith.constant 0.000000e+00 : f32
      %15 = vector.broadcast %cst_10 : f32 to vector<8x1xf32>
      %c0_11 = arith.constant 0 : index
      %c0_12 = arith.constant 0 : index
      %16 = vector.load %arg4[%c0_11, %c0_12] : memref<8x1xf32, #tpu.memory_space<vmem>>, vector<8x1xf32>
      tpu.vector_store %arg4[%c0_11, %c0_12], %15 {strides = array<i32>} : memref<8x1xf32, #tpu.memory_space<vmem>>, vector<8x1xf32>,
    } else {
    }
    %c0 = arith.constant 0 : index
    %c0_1 = arith.constant 0 : index
    %3 = memref.load %arg2[%c0, %c0_1] : memref<1x1xf32, #tpu.memory_space<smem>>
    %c0_2 = arith.constant 0 : index
    %c0_3 = arith.constant 0 : index
    %4 = vector.load %arg3[%c0_2, %c0_3] : memref<8x128xf32, #tpu.memory_space<vmem>>, vector<8x128xf32>
    %5 = vector.broadcast %3 : f32 to vector<8x128xf32>
    %6 = arith.minimumf %5, %4 : vector<8x128xf32>
    %c0_4 = arith.constant 0 : index
    %c0_5 = arith.constant 0 : index
    %7 = vector.load %arg4[%c0_4, %c0_5] : memref<8x1xf32, #tpu.memory_space<vmem>>, vector<8x1xf32>
    %cst = arith.constant dense<0.000000e+00> : vector<8xf32>
    %8 = vector.multi_reduction <add>, %6, %cst [1] : vector<8x128xf32> to vector<8xf32>
    %9 = vector.shape_cast %8 : vector<8xf32> to vector<8x1xf32>
    %10 = arith.addf %7, %9 : vector<8x1xf32>
    %c0_6 = arith.constant 0 : index
    %c0_7 = arith.constant 0 : index
    %11 = vector.load %arg4[%c0_6, %c0_7] : memref<8x1xf32, #tpu.memory_space<vmem>>, vector<8x1xf32>
    tpu.vector_store %arg4[%c0_6, %c0_7], %10 {strides = array<i32>} : memref<8x1xf32, #tpu.memory_space<vmem>>, vector<8x1xf32>,
    %c0_i32_8 = arith.constant 0 : i32
    %12 = arith.cmpi eq, %arg1, %c0_i32_8 : i32
    %13 = arith.extui %12 : i1 to i32
    %c0_i32_9 = arith.constant 0 : i32
    %14 = arith.cmpi ne, %13, %c0_i32_9 : i32
    scf.if %14 {
      %cst_10 = arith.constant 5.000000e+00 : f32
      %15 = arith.mulf %cst_10, %3 : f32
      %c0_11 = arith.constant 0 : index
      %c0_12 = arith.constant 0 : index
      %16 = vector.load %arg4[%c0_11, %c0_12] : memref<8x1xf32, #tpu.memory_space<vmem>>, vector<8x1xf32>
      %cst_13 = arith.constant 5.468750e-02 : f32
      %17 = vector.broadcast %cst_13 : f32 to vector<8x1xf32>
      %18 = arith.mulf %17, %16 : vector<8x1xf32>
      %19 = vector.broadcast %15 : f32 to vector<8x1xf32>
      %20 = arith.subf %19, %18 : vector<8x1xf32>
      %c0_14 = arith.constant 0 : index
      %c0_15 = arith.constant 0 : index
      %21 = vector.load %arg4[%c0_14, %c0_15] : memref<8x1xf32, #tpu.memory_space<vmem>>, vector<8x1xf32>
      tpu.vector_store %arg4[%c0_14, %c0_15], %20 {strides = array<i32>} : memref<8x1xf32, #tpu.memory_space<vmem>>, vector<8x1xf32>,
    } else {
    }
    return
  }
  func.func @transform_0(%arg0: i32, %arg1: i32) -> (i32, i32) {
    %c0_i32 = arith.constant 0 : i32
    %c0_i32_0 = arith.constant 0 : i32
    %c0_i32_1 = arith.constant 0 : i32
    return %c0_i32, %c0_i32_0 : i32, i32
  }
  func.func @transform_1(%arg0: i32, %arg1: i32) -> (i32, i32) {
    %c0_i32 = arith.constant 0 : i32
    return %arg0, %arg1 : i32, i32
  }
  func.func @transform_2(%arg0: i32, %arg1: i32) -> (i32, i32) {
    %c0_i32 = arith.constant 0 : i32
    %c0_i32_0 = arith.constant 0 : i32
    return %arg0, %c0_i32 : i32, i32
  }
}

</mosaic_0001>

<llo_original>
// kernel: tpu_custom_call.1
$region0: #{tpu_custom_call.1}
  #allocation0 [shape = 'u32[]', space=smem, size = 0x4, offset = 0x4, fixed_abs, tag = 'smem constant byte address 0x4 - core index']
  #allocation1 [shape = 'u32[144,128]{1,0:T(1,128)}', space=vmem, size = 0x12000, scoped, tag = 'internal scratch']
  #allocation2 [shape = 'f32[1,1]{1,0:T(1,128)S(6)}', space=smem, size = 0x200, scoped, tag = 'scoped memory for tpu_custom_call.1']
  %s0 = inlined_call_operand.<no memory space> [shape: f32[1,1], index: 0, kind: input, shape index: {}]
  %s1 = inlined_call_operand.hbm [shape: f32[8,128], index: 1, kind: input, shape index: {}]
  %s2 = inlined_call_operand.vmem [shape: f32[8,1], index: 2, kind: output, shape index: {}]
  %s3 = sld [smem:[#allocation0]]
  $region30: #{tpu_custom_call.1} parent=0
    _
  %s5 = ssub.s32 1, %s3
  %s6 = scalar_select 0, %s5, %s3
  %7 = sst [smem:[#allocation2]] %s0
  $region1: #{tpu_custom_call.1} parent=0
    #allocation3 [shape = 'u8[4096]{0}', space=vmem, size = 0x1000, scoped, tag = 'input window, operand 1, single buffered']
    #allocation4 [shape = 's32[1]{0}', space=sflag, size = 0x4, scoped, tag = 'scoped memory for tpu_custom_call.1']
    %8 = vsyncpa [#allocation4], 0
    // Predicated region
    $region2: #{tpu_custom_call.1} parent=1 // pred_check
      _
    $region3: #{tpu_custom_call.1} parent=1 // pred_check_branch
      %10 = sbr.rel (0) target = $region5
    $region4: #{tpu_custom_call.1} parent=1 // pred_region
      _
    $region5: #{tpu_custom_call.1} parent=1 // pred_fallthru
      _
    // Predicated region
    $region6: #{tpu_custom_call.1} parent=1 // pred_check
      _
    $region7: #{tpu_custom_call.1} parent=1 // pred_check_branch
      %12 = sbr.rel (0) target = $region9
    $region8: #{tpu_custom_call.1} parent=1 // pred_region
      %s14 = ssub.s32 128, 128
      %15 = vsyncadd [#allocation4], %s14
      %s17 = sshll.u32 [#allocation3], 4
      %s18 = int_to_ptr.vmem [resolvable:$true] %s17
      %20 = dma.hbm_to_vmem [thread:$0]  %s1, 128, %s18, [#allocation4]
    $region9: #{tpu_custom_call.1} parent=1 // pred_fallthru
      _
    // Predicated region
    $region10: #{tpu_custom_call.1} parent=1 // pred_check
      _
    $region11: #{tpu_custom_call.1} parent=1 // pred_check_branch
      %22 = sbr.rel (0) target = $region13
    $region12: #{tpu_custom_call.1} parent=1 // pred_region
      %23 = dma.done [#allocation4], 128
    $region13: #{tpu_custom_call.1} parent=1 // pred_fallthru
      _
    %p24 = scmp.eq.s32.totalorder 0, 0
    // Predicated region
    $region14: #{tpu_custom_call.1} parent=1 // pred_check
      %p25 = pneg %p24
    $region15: #{tpu_custom_call.1} parent=1 // pred_check_branch
      %27 = sbr.rel (%p25) target = $region17
    $region16: #{tpu_custom_call.1} parent=1 // pred_region
      %vm28 = vcmask 7168
      %29 = vst.msk [vmem:[%s2] sm:$0xff] %vm28, 0.0
    $region17: #{tpu_custom_call.1} parent=1 // pred_fallthru
      _
    %s30 = sld [smem:[#allocation2]]
    %v31 = vld [vmem:[#allocation3] sm:$0xff]
    %v32 = vstv %s30
    %v33 = vmin.f32 %v32, %v31
    %v34 = vld [vmem:[%s2] sm:$0xff]
    %35 = vadd.xlane.f32.xlu0 %v33
    %v36 = vpop.xlane.xlu0 %35
    %v37 = vadd.f32 %v34, %v36
    %vm38 = vcmask 7168
    %39 = vst.msk [vmem:[%s2] sm:$0xff] %vm38, %v37
    // Predicated region
    $region18: #{tpu_custom_call.1} parent=1 // pred_check
      %p40 = pneg %p24
    $region19: #{tpu_custom_call.1} parent=1 // pred_check_branch
      %42 = sbr.rel (%p40) target = $region21
    $region20: #{tpu_custom_call.1} parent=1 // pred_region
      %s43 = smul.f32 %s30, 5.0
      %v44 = vld [vmem:[%s2] sm:$0xff]
      %v45 = vmul.f32 %v44, 0.0546875
      %v46 = vstv %s43
      %v47 = vsub.f32 %v46, %v45
      %48 = vst.msk [vmem:[%s2] sm:$0xff] %vm38, %v47
    $region21: #{tpu_custom_call.1} parent=1 // pred_fallthru
      _
    // Predicated region
    $region22: #{tpu_custom_call.1} parent=1 // pred_check
      _
    $region23: #{tpu_custom_call.1} parent=1 // pred_check_branch
      %50 = sbr.rel (0) target = $region25
    $region24: #{tpu_custom_call.1} parent=1 // pred_region
      _
    $region25: #{tpu_custom_call.1} parent=1 // pred_fallthru
      _
    // Predicated region
    $region26: #{tpu_custom_call.1} parent=1 // pred_check
      _
    $region27: #{tpu_custom_call.1} parent=1 // pred_check_branch
      %52 = sbr.rel (0) target = $region29
    $region28: #{tpu_custom_call.1} parent=1 // pred_region
      _
    $region29: #{tpu_custom_call.1} parent=1 // pred_fallthru
      _
    %53 = vsyncpa [#allocation4], 1

</llo_original>
